<compile_context>
chip_gen: v6e
topology: v6e:2x2x1
jax: 0.10.0
libtpu: 0.0.40
codegen_flags: <defaults>
</compile_context>

<pallas_src>
import functools

import jax
import jax.numpy as jnp
from jax import lax
from jax.experimental import pallas as pl
from jax.experimental.pallas import tpu as pltpu

LANES = 128          # vreg lane width
CHUNK_ROWS = 1024    # rows per unrolled inner step: 1024*128*4B = 512 KiB f32


def _round_up(x, m):
    return ((x + m - 1) // m) * m


def _sublane_pack(dtype):
    """Native sublane packing: f32 -> 8, bf16 -> 16, int8/fp8 -> 32."""
    itemsize = jnp.dtype(dtype).itemsize
    return 8 * max(1, 4 // max(1, itemsize))


def _device_config():
    """Generation-aware tiling: streams, max block rows, VMEM budget."""
    kind = ""
    try:
        kind = jax.devices()[0].device_kind.lower()
    except Exception:
        pass
    if "v7" in kind or "7x" in kind:
        # 64 MiB VMEM / TC: 4 MiB per input tile -> 16 MiB double-buffered
        # (+ ~2-3 MiB chunk temporaries); stay well under the physical cap.
        return dict(ncores=2, tr_max=8192, vmem_limit=48 * 1024 * 1024,
                    core_parallel=True)
    # v5e / v6e: 128 MiB VMEM, single TensorCore -> go bigger (8 MiB / input).
    return dict(ncores=1, tr_max=16384, vmem_limit=100 * 1024 * 1024,
                core_parallel=False)


def _charbonnier_partial_kernel(pred_ref, tgt_ref, acc_ref, *, eps, chunk,
                                n_chunks, spc, full_blocks, tail_valid,
                                unroll):
    """Accumulate partial sums of sqrt((pred - tgt)^2 + eps) into a lane-dense
    (1, 8, 128) f32 accumulator block (final cross-lane reduce in wrapper)."""
    c = pl.program_id(0)
    i = pl.program_id(1)

    @pl.when(i == 0)
    def _init():
        acc_ref[...] = jnp.zeros_like(acc_ref)

    block_idx = c * spc + i

    def tile_sum(masked):
        def body(j, acc):
            off = pl.multiple_of(j * chunk, chunk)
            p = pred_ref[pl.ds(off, chunk), :].astype(jnp.float32)
            t = tgt_ref[pl.ds(off, chunk), :].astype(jnp.float32)
            d = p - t
            term = jnp.sqrt(d * d + jnp.float32(eps))
            if masked:
                # Block-local element index: fits int32 for any tile size,
                # and only the edge block ever pays for this arithmetic.
                row = lax.broadcasted_iota(jnp.int32, (chunk, LANES), 0)
                lane = lax.broadcasted_iota(jnp.int32, (chunk, LANES), 1)
                lidx = (off + row) * LANES + lane
                term = jnp.where(lidx < tail_valid, term, 0.0)
            # (chunk,128) -> (chunk//8, 8, 128) -> pure VPU adds into an
            # (8,128) partial; no per-step cross-lane reduce.
            return acc + jnp.sum(term.reshape(chunk // 8, 8, LANES), axis=0)

        return lax.fori_loop(0, n_chunks, body,
                             jnp.zeros((8, LANES), jnp.float32),
                             unroll=unroll)

    if full_blocks > 0:
        # Interior, fully-valid blocks: no mask / iota work at all.
        @pl.when(block_idx < full_blocks)
        def _interior():
            acc_ref[...] += tile_sum(masked=False)[None]

    if tail_valid > 0:
        # The single ragged edge block (block index == full_blocks == nb - 1).
        @pl.when(block_idx == full_blocks)
        def _edge():
            acc_ref[...] += tile_sum(masked=True)[None]

    # block_idx > nb - 1 only occurs for index-clamped duplicate blocks when
    # work doesn't split evenly across streams; they contribute nothing.


def charbonnier_loss(pred, target, weight=None, *, loss_weight=1.0,
                     reduction='mean', eps=1e-12):
    """Pallas-backed CharbonnierLoss forward.  pred/target: (N, C, H, W)."""
    if reduction not in ('mean', 'sum'):
        # TODO(synk): 'none' reduction (elementwise output) not wired up here.
        raise ValueError(f'Unsupported reduction mode: {reduction}')
    if weight is not None:
        # TODO(synk): elementwise weight tensor path not implemented.
        raise NotImplementedError('weight is not supported in this kernel')

    assert pred.shape == target.shape
    n_elems = pred.size
    if n_elems == 0:
        return jnp.float32(loss_weight) * jnp.float32(0.0)

    cfg = _device_config()
    ncores, tr_max = cfg['ncores'], cfg['tr_max']

    # Flatten in native dtype (kernel casts per-chunk, so bf16 inputs stream
    # at half the HBM bytes).  Pad only ragged sizes, at dtype-native
    # (sublane*lane) granularity; the in-kernel mask zeroes the tail exactly.
    p = pred.reshape(-1)
    t = target.reshape(-1)
    min_tile = _sublane_pack(pred.dtype) * LANES
    padded = _round_up(n_elems, min_tile)
    if padded != n_elems:
        # TODO(synk): for very large ragged inputs this pad is a full HBM
        # copy; a manual-DMA (memory_space=pl.ANY) tail path would avoid it.
        p = jnp.pad(p, (0, padded - n_elems))
        t = jnp.pad(t, (0, padded - n_elems))
    rows = padded // LANES

    # Block rows (tr) and inner chunk rows: tr is always a multiple of chunk,
    # chunk a multiple of 8, and tr <= rows (trailing partial block is fine
    # and fully masked).
    if rows <= CHUNK_ROWS:
        tr = rows
        chunk = rows
    else:
        tr = min(tr_max, (rows // CHUNK_ROWS) * CHUNK_ROWS)
        chunk = CHUNK_ROWS
    n_chunks = tr // chunk

    nb = pl.cdiv(rows, tr)              # row-blocks of work
    spc = pl.cdiv(nb, ncores)           # grid steps per partial-sum stream

    block_elems = tr * LANES
    tail_elems = n_elems - (nb - 1) * block_elems
    if tail_elems == block_elems:       # everything divides exactly
        full_blocks, tail_valid = nb, 0
    else:
        full_blocks, tail_valid = nb - 1, tail_elems

    p2 = p.reshape(rows, LANES)
    t2 = t.reshape(rows, LANES)

    if ncores * spc > nb:
        # Clamp so DMAs never start past the array end; the duplicated
        # (over-covered) steps contribute nothing inside the kernel.
        def in_map(c, i):
            return (jnp.minimum(c * spc + i, nb - 1), 0)
    else:
        def in_map(c, i):
            return (c * spc + i, 0)

    arb = getattr(pltpu, "ARBITRARY", "arbitrary")
    if ncores > 1 and cfg['core_parallel']:
        first_sem = getattr(pltpu, "CORE_PARALLEL", "parallel")
    else:
        first_sem = arb

    partials = pl.pallas_call(
        functools.partial(
            _charbonnier_partial_kernel, eps=float(eps), chunk=chunk,
            n_chunks=n_chunks, spc=spc, full_blocks=full_blocks,
            tail_valid=tail_valid, unroll=True),
        out_shape=jax.ShapeDtypeStruct((ncores, 8, LANES), jnp.float32),
        grid_spec=pltpu.PrefetchScalarGridSpec(
            num_scalar_prefetch=0,
            grid=(ncores, spc),
            in_specs=[
                pl.BlockSpec((tr, LANES), in_map),
                pl.BlockSpec((tr, LANES), in_map),
            ],
            out_specs=pl.BlockSpec((1, 8, LANES), lambda c, i: (c, 0, 0)),
        ),
        compiler_params=pltpu.CompilerParams(
            dimension_semantics=(first_sem, arb),
            vmem_limit_bytes=cfg['vmem_limit']),
    )(p2, t2)

    total = jnp.sum(partials)           # tiny final reduce (ncores*8*128)
    if reduction == 'mean':
        total = total / jnp.float32(n_elems)
    return jnp.float32(loss_weight) * total


if __name__ == "__main__":
    key = jax.random.PRNGKey(0)
    k1, k2, k3, k4, k5, k6 = jax.random.split(key, 6)

    # Main check: (N, C, H, W) = (2, 4, 16, 16), mean reduction.
    shape = (2, 4, 16, 16)
    pred = jax.random.normal(k1, shape, dtype=jnp.float32)
    target = jax.random.normal(k2, shape, dtype=jnp.float32)
    loss = jax.block_until_ready(
        charbonnier_loss(pred, target, loss_weight=1.0,
                         reduction='mean', eps=1e-12))
    ref = jnp.mean(jnp.sqrt((pred - target) ** 2 + 1e-12))
    assert jnp.allclose(loss, ref, rtol=1e-5, atol=1e-6), (loss, ref)

    # Ragged-tail / masking path: element count not a multiple of 8*128.
    shape2 = (1, 3, 7, 11)
    pred2 = jax.random.normal(k3, shape2, dtype=jnp.float32)
    target2 = jax.random.normal(k4, shape2, dtype=jnp.float32)
    loss2 = jax.block_until_ready(
        charbonnier_loss(pred2, target2, loss_weight=0.5,
                         reduction='sum', eps=1e-6))
    ref2 = 0.5 * jnp.sum(jnp.sqrt((pred2 - target2) ** 2 + 1e-6))
    assert jnp.allclose(loss2, ref2, rtol=1e-5, atol=1e-6), (loss2, ref2)

    # Medium check: multi-block grid, chunked inner loop, partial trailing
    # input block, and the masked edge path all exercised.
    shape3 = (2, 3, 211, 211)
    pred3 = jax.random.normal(k5, shape3, dtype=jnp.float32)
    target3 = jax.random.normal(k6, shape3, dtype=jnp.float32)
    loss3 = jax.block_until_ready(
        charbonnier_loss(pred3, target3, loss_weight=1.0,
                         reduction='mean', eps=1e-12))
    ref3 = jnp.mean(jnp.sqrt((pred3 - target3) ** 2 + 1e-12))
    assert jnp.allclose(loss3, ref3, rtol=1e-4, atol=1e-6), (loss3, ref3)

    print("KERNEL_OK")
</pallas_src>

<mosaic_0001>
module attributes {stable_mosaic.version = 11 : i64} {
  func.func @_charbonnier_partial_kernel(%arg0: i32, %arg1: i32, %arg2: memref<16x128xf32, #tpu.memory_space<vmem>>, %arg3: memref<16x128xf32, #tpu.memory_space<vmem>>, %arg4: memref<1x8x128xf32, #tpu.memory_space<vmem>>) attributes {dimension_semantics = [#tpu.dimension_semantics<arbitrary>, #tpu.dimension_semantics<arbitrary>], iteration_bounds = array<i64: 1, 1>, scalar_prefetch = 0 : i64, scratch_operands = 0 : i64, tpu.core_type = #tpu.core_type<tc>, window_params = [{transform_indices = @transform_0, window_bounds = array<i64: 16, 128>}, {transform_indices = @transform_1, window_bounds = array<i64: 16, 128>}, {transform_indices = @transform_2, window_bounds = array<i64: 1, 8, 128>}]} {
    %c0_i32 = arith.constant 0 : i32
    %0 = arith.cmpi eq, %arg1, %c0_i32 : i32
    %1 = arith.extui %0 : i1 to i32
    %c0_i32_0 = arith.constant 0 : i32
    %2 = arith.cmpi ne, %1, %c0_i32_0 : i32
    scf.if %2 {
      %cst = arith.constant 0.000000e+00 : f32
      %8 = vector.broadcast %cst : f32 to vector<1x8x128xf32>
      %c0 = arith.constant 0 : index
      %c0_3 = arith.constant 0 : index
      %c0_4 = arith.constant 0 : index
      %9 = vector.load %arg4[%c0, %c0_3, %c0_4] : memref<1x8x128xf32, #tpu.memory_space<vmem>>, vector<1x8x128xf32>
      tpu.vector_store %arg4[%c0, %c0_3, %c0_4], %8 {strides = array<i32>} : memref<1x8x128xf32, #tpu.memory_space<vmem>>, vector<1x8x128xf32>,
    } else {
    }
    %c1_i32 = arith.constant 1 : i32
    %3 = arith.muli %arg0, %c1_i32 : i32
    %4 = arith.addi %3, %arg1 : i32
    %c1_i32_1 = arith.constant 1 : i32
    %5 = arith.cmpi slt, %4, %c1_i32_1 : i32
    %6 = arith.extui %5 : i1 to i32
    %c0_i32_2 = arith.constant 0 : i32
    %7 = arith.cmpi ne, %6, %c0_i32_2 : i32
    scf.if %7 {
      %c0 = arith.constant 0 : index
      %c0_3 = arith.constant 0 : index
      %c0_4 = arith.constant 0 : index
      %8 = vector.load %arg4[%c0, %c0_3, %c0_4] : memref<1x8x128xf32, #tpu.memory_space<vmem>>, vector<1x8x128xf32>
      %cst = arith.constant 0.000000e+00 : f32
      %9 = vector.broadcast %cst : f32 to vector<8x128xf32>
      %c0_i32_5 = arith.constant 0 : i32
      %c16_i32 = arith.constant 16 : i32
      %10 = arith.muli %c0_i32_5, %c16_i32 : i32
      %11 = tpu.assume_multiple %10, 16 : i32
      %12 = arith.index_cast %11 : i32 to index
      %c0_6 = arith.constant 0 : index
      %13 = vector.load %arg2[%12, %c0_6] : memref<16x128xf32, #tpu.memory_space<vmem>>, vector<16x128xf32>
      %14 = arith.index_cast %11 : i32 to index
      %c0_7 = arith.constant 0 : index
      %15 = vector.load %arg3[%14, %c0_7] : memref<16x128xf32, #tpu.memory_space<vmem>>, vector<16x128xf32>
      %16 = arith.subf %13, %15 : vector<16x128xf32>
      %17 = arith.mulf %16, %16 : vector<16x128xf32>
      %cst_8 = arith.constant 9.99999996E-13 : f32
      %18 = vector.broadcast %cst_8 : f32 to vector<16x128xf32>
      %19 = arith.addf %17, %18 : vector<16x128xf32>
      %20 = math.sqrt %19 : vector<16x128xf32>
      %21 = vector.shape_cast %20 : vector<16x128xf32> to vector<2x8x128xf32>
      %cst_9 = arith.constant dense<0.000000e+00> : vector<8x128xf32>
      %22 = vector.multi_reduction <add>, %21, %cst_9 [0] : vector<2x8x128xf32> to vector<8x128xf32>
      %23 = arith.addf %9, %22 : vector<8x128xf32>
      %c1_i32_10 = arith.constant 1 : i32
      %24 = vector.shape_cast %23 : vector<8x128xf32> to vector<1x8x128xf32>
      %25 = arith.addf %8, %24 : vector<1x8x128xf32>
      %c0_11 = arith.constant 0 : index
      %c0_12 = arith.constant 0 : index
      %c0_13 = arith.constant 0 : index
      %26 = vector.load %arg4[%c0_11, %c0_12, %c0_13] : memref<1x8x128xf32, #tpu.memory_space<vmem>>, vector<1x8x128xf32>
      tpu.vector_store %arg4[%c0_11, %c0_12, %c0_13], %25 {strides = array<i32>} : memref<1x8x128xf32, #tpu.memory_space<vmem>>, vector<1x8x128xf32>,
    } else {
    }
    return
  }
  func.func @transform_0(%arg0: i32, %arg1: i32) -> (i32, i32) {
    %c1_i32 = arith.constant 1 : i32
    %0 = arith.muli %arg0, %c1_i32 : i32
    %1 = arith.addi %0, %arg1 : i32
    %c0_i32 = arith.constant 0 : i32
    %c0_i32_0 = arith.constant 0 : i32
    return %1, %c0_i32 : i32, i32
  }
  func.func @transform_1(%arg0: i32, %arg1: i32) -> (i32, i32) {
    %c1_i32 = arith.constant 1 : i32
    %0 = arith.muli %arg0, %c1_i32 : i32
    %1 = arith.addi %0, %arg1 : i32
    %c0_i32 = arith.constant 0 : i32
    %c0_i32_0 = arith.constant 0 : i32
    return %1, %c0_i32 : i32, i32
  }
  func.func @transform_2(%arg0: i32, %arg1: i32) -> (i32, i32, i32) {
    %c0_i32 = arith.constant 0 : i32
    %c0_i32_0 = arith.constant 0 : i32
    %c0_i32_1 = arith.constant 0 : i32
    return %arg0, %c0_i32, %c0_i32_0 : i32, i32, i32
  }
}

</mosaic_0001>

<llo_original>
// kernel: tpu_custom_call.1
$region0: #{tpu_custom_call.1}
  #allocation0 [shape = 'u32[]', space=smem, size = 0x4, offset = 0x4, fixed_abs, tag = 'smem constant byte address 0x4 - core index']
  #allocation1 [shape = 'u32[144,128]{1,0:T(1,128)}', space=vmem, size = 0x12000, scoped, tag = 'internal scratch']
  %s0 = inlined_call_operand.hbm [shape: f32[16,128], index: 0, kind: input, shape index: {}]
  %s1 = inlined_call_operand.hbm [shape: f32[16,128], index: 1, kind: input, shape index: {}]
  %s2 = inlined_call_operand.hbm [shape: f32[1,8,128], index: 2, kind: output, shape index: {}]
  %s3 = sld [smem:[#allocation0]]
  $region34: #{tpu_custom_call.1} parent=0
    _
  %s5 = ssub.s32 1, %s3
  %s6 = scalar_select 0, %s5, %s3
  $region1: #{tpu_custom_call.1} parent=0
    #allocation2 [shape = 'u8[8192]{0}', space=vmem, size = 0x2000, scoped, tag = 'input window, operand 0, single buffered']
    #allocation3 [shape = 's32[1]{0}', space=sflag, size = 0x4, scoped, tag = 'scoped memory for tpu_custom_call.1']
    #allocation4 [shape = 's32[1]{0}', space=sflag, size = 0x4, scoped, tag = 'scoped memory for tpu_custom_call.1']
    #allocation5 [shape = 'u8[8192]{0}', space=vmem, size = 0x2000, scoped, tag = 'input window, operand 1, single buffered']
    #allocation6 [shape = 's32[1]{0}', space=sflag, size = 0x4, scoped, tag = 'scoped memory for tpu_custom_call.1']
    #allocation7 [shape = 'u8[4096]{0}', space=vmem, size = 0x1000, scoped, tag = 'output window, operand 0, single buffered']
    %7 = vsyncpa [#allocation3], 0
    %8 = vsyncpa [#allocation6], 0
    %9 = vsyncpa [#allocation4], 0
    // Predicated region
    $region2: #{tpu_custom_call.1} parent=1 // pred_check
      _
    $region3: #{tpu_custom_call.1} parent=1 // pred_check_branch
      %11 = sbr.rel (0) target = $region5
    $region4: #{tpu_custom_call.1} parent=1 // pred_region
      %s12 = sadd.s32 0, 0
      %s13 = smul.u32 2, %s12
      %s15 = ssub.s32 256, 256
      %16 = vsyncadd [#allocation3], %s15
      %s17 = smul.addr %s13, 128
      %s18 = scalar_lea.hbm %s0, %s17
      %s19 = sshll.u32 [#allocation2], 4
      %s20 = int_to_ptr.vmem [resolvable:$true] %s19
      %25 = dma.hbm_to_vmem [thread:$0]  %s18, 256, %s20, [#allocation3], 128, 128, 8
    $region5: #{tpu_custom_call.1} parent=1 // pred_fallthru
      _
    // Predicated region
    $region6: #{tpu_custom_call.1} parent=1 // pred_check
      _
    $region7: #{tpu_custom_call.1} parent=1 // pred_check_branch
      %27 = sbr.rel (0) target = $region9
    $region8: #{tpu_custom_call.1} parent=1 // pred_region
      %s28 = sadd.s32 0, 0
      %s29 = smul.u32 2, %s28
      %s31 = ssub.s32 256, 256
      %32 = vsyncadd [#allocation6], %s31
      %s33 = smul.addr %s29, 128
      %s34 = scalar_lea.hbm %s1, %s33
      %s35 = sshll.u32 [#allocation5], 4
      %s36 = int_to_ptr.vmem [resolvable:$true] %s35
      %41 = dma.hbm_to_vmem [thread:$0]  %s34, 256, %s36, [#allocation6], 128, 128, 8
    $region9: #{tpu_custom_call.1} parent=1 // pred_fallthru
      _
    // Predicated region
    $region10: #{tpu_custom_call.1} parent=1 // pred_check
      _
    $region11: #{tpu_custom_call.1} parent=1 // pred_check_branch
      %43 = sbr.rel (0) target = $region13
    $region12: #{tpu_custom_call.1} parent=1 // pred_region
      %44 = dma.done [#allocation3], 256
    $region13: #{tpu_custom_call.1} parent=1 // pred_fallthru
      _
    // Predicated region
    $region14: #{tpu_custom_call.1} parent=1 // pred_check
      _
    $region15: #{tpu_custom_call.1} parent=1 // pred_check_branch
      %46 = sbr.rel (0) target = $region17
    $region16: #{tpu_custom_call.1} parent=1 // pred_region
      %47 = dma.done [#allocation6], 256
    $region17: #{tpu_custom_call.1} parent=1 // pred_fallthru
      _
    %s48 = sadd.s32 0, 0
    %s49 = smul.u32 2, %s48
    %s50 = sadd.s32 0, 0
    %s51 = smul.u32 2, %s50
    %p52 = scmp.eq.s32.totalorder 0, 0
    // Predicated region
    $region18: #{tpu_custom_call.1} parent=1 // pred_check
      %p53 = pneg %p52
    $region19: #{tpu_custom_call.1} parent=1 // pred_check_branch
      %55 = sbr.rel (%p53) target = $region21
    $region20: #{tpu_custom_call.1} parent=1 // pred_region
      %56 = vst [vmem:[#allocation7] sm:$0xff] 0.0
    $region21: #{tpu_custom_call.1} parent=1 // pred_fallthru
      _
    %s57 = sadd.s32 0, 0
    %p58 = scmp.lt.s32.totalorder %s57, 1
    // Predicated region
    $region22: #{tpu_custom_call.1} parent=1 // pred_check
      %p59 = pneg %p58
    $region23: #{tpu_custom_call.1} parent=1 // pred_check_branch
      %61 = sbr.rel (%p59) target = $region25
    $region24: #{tpu_custom_call.1} parent=1 // pred_region
      %v62 = vld [vmem:[#allocation7] sm:$0xff]
      %v63 = vld [vmem:[#allocation2] sm:$0xff]
      %v64 = vld [vmem:[#allocation2 + $0x8] sm:$0xff]
      %v65 = vld [vmem:[#allocation5] sm:$0xff]
      %v66 = vld [vmem:[#allocation5 + $0x8] sm:$0xff]
      %v67 = vsub.f32 %v63, %v65
      %v68 = vsub.f32 %v64, %v66
      %v69 = vmul.f32 %v67, %v67
      %v70 = vmul.f32 %v68, %v68
      %v71 = vadd.f32 %v69, 1e-12
      %v72 = vadd.f32 %v70, 1e-12
      %v73 = vrsqrt.pop %v71
      %v74 = vmul.f32 %v71, %v73
      %vm75 = vcmp.eq.f32.partialorder %v71, inf
      %v76 = vsel %vm75, %v71, %v74
      %vm77 = vcmp.eq.f32.partialorder %v71, 0.0
      %v78 = vand.u32 %v71, 2147483648
      %v79 = vsel %vm77, %v78, %v76
      %v80 = vrsqrt.pop %v72
      %v81 = vmul.f32 %v72, %v80
      %vm82 = vcmp.eq.f32.partialorder %v72, inf
      %v83 = vsel %vm82, %v72, %v81
      %vm84 = vcmp.eq.f32.partialorder %v72, 0.0
      %v85 = vand.u32 %v72, 2147483648
      %v86 = vsel %vm84, %v85, %v83
      %v87 = vadd.f32 %v79, %v86
      %v88 = vadd.f32 %v87, 0.0
      %v89 = vadd.f32 %v62, %v88
      %90 = vst [vmem:[#allocation7] sm:$0xff] %v89
    $region25: #{tpu_custom_call.1} parent=1 // pred_fallthru
      _
    // Predicated region
    $region26: #{tpu_custom_call.1} parent=1 // pred_check
      _
    $region27: #{tpu_custom_call.1} parent=1 // pred_check_branch
      %92 = sbr.rel (0) target = $region29
    $region28: #{tpu_custom_call.1} parent=1 // pred_region
      %s94 = ssub.s32 128, 128
      %95 = vsyncadd [#allocation4], %s94
      %s97 = sshll.u32 [#allocation7], 4
      %s98 = int_to_ptr.vmem [resolvable:$true] %s97
      %100 = dma.vmem_to_hbm [thread:$0]  %s98, 128, %s2, [#allocation4]
    $region29: #{tpu_custom_call.1} parent=1 // pred_fallthru
      _
    // Predicated region
    $region30: #{tpu_custom_call.1} parent=1 // pred_check
      _
    $region31: #{tpu_custom_call.1} parent=1 // pred_check_branch
      %102 = sbr.rel (0) target = $region33
    $region32: #{tpu_custom_call.1} parent=1 // pred_region
      %103 = dma.done [#allocation4], 128
    $region33: #{tpu_custom_call.1} parent=1 // pred_fallthru
      _
    %104 = vsyncpa [#allocation3], 1
    %105 = vsyncpa [#allocation6], 1
    %106 = vsyncpa [#allocation4], 1

</llo_original>
